<compile_context>
chip_gen: v6e
topology: v6e:2x2x1
jax: 0.10.0
libtpu: 0.0.40
codegen_flags: <defaults>
</compile_context>

<pallas_src>
import functools

import jax
import jax.numpy as jnp
from jax.experimental import pallas as pl
from jax.experimental.pallas import tpu as pltpu

LANE = 128  # TPU lane width


def _round_up(n, m):
    return ((n + m - 1) // m) * m


def _mlp_kernel(x_ref,
                w1_ref, b1_ref,
                w2_ref, b2_ref,
                w3_ref, b3_ref,
                w4_ref, b4_ref,
                out_ref):
    # bf16 cast in-kernel (x is streamed from HBM as raw f32, no wrapper pass).
    x = x_ref[...].astype(jnp.bfloat16)

    # Layer 1: Linear + ReLU  (K = real input_dim, N padded to 128)
    h = jnp.dot(x, w1_ref[...], preferred_element_type=jnp.float32)
    h = jnp.maximum(h + b1_ref[...], 0.0)
    # Dropout(p=0.3) is identity in eval/inference mode.

    # Layer 2: Linear + ReLU
    h = jnp.dot(h.astype(jnp.bfloat16), w2_ref[...],
                preferred_element_type=jnp.float32)
    h = jnp.maximum(h + b2_ref[...], 0.0)

    # Layer 3: Linear + ReLU
    h = jnp.dot(h.astype(jnp.bfloat16), w3_ref[...],
                preferred_element_type=jnp.float32)
    h = jnp.maximum(h + b3_ref[...], 0.0)

    # Layer 4: Linear (no activation).  Output columns are UN-padded
    # (output_dim), so the HBM writeback is ~16x smaller than a padded tile;
    # only the in-VMEM store is masked, which is negligible.
    y = jnp.dot(h.astype(jnp.bfloat16), w4_ref[...],
                preferred_element_type=jnp.float32)
    out_ref[...] = (y + b4_ref[...]).astype(out_ref.dtype)


def pack_params(params):
    """Pad (to 128 lanes) and cast the weights ONCE, outside the per-call path.

    PyTorch Linear stores weight as (out, in); here weights are (in, out) so
    the kernel computes x @ W + b directly.  Layer-1 rows stay at input_dim
    (x is not padded) and layer-4 cols stay at output_dim (output not padded).
    """
    (w1, b1), (w2, b2), (w3, b3), (w4, b4) = params
    d_in = w1.shape[0]
    h1 = _round_up(w1.shape[1], LANE)
    h2 = _round_up(w2.shape[1], LANE)
    h3 = _round_up(w3.shape[1], LANE)
    d_out = w4.shape[1]

    def pad_w(w, rows, cols):
        return jnp.pad(w, ((0, rows - w.shape[0]),
                           (0, cols - w.shape[1]))).astype(jnp.bfloat16)

    def pad_b(b, cols):
        return jnp.pad(b, ((0, 0), (0, cols - b.shape[1]))).astype(jnp.float32)

    return (pad_w(w1, d_in, h1), pad_b(b1, h1),
            pad_w(w2, h1, h2), pad_b(b2, h2),
            pad_w(w3, h2, h3), pad_b(b3, h3),
            pad_w(w4, h3, d_out), pad_b(b4, d_out))


def _choose_batch_tile(batch, block_batch):
    """Batch tile: multiple of 128 (or the full batch), >=2 tiles on big batches."""
    if batch <= LANE:
        return batch                       # single tile == full dim (legal)
    tb = min(_round_up(block_batch, LANE), _round_up(batch, LANE))
    if tb >= batch:
        if batch > 2 * LANE:
            # Split so the "parallel" batch axis has >=2 steps (v7x has 2 TCs).
            tb = _round_up(pl.cdiv(batch, 2), LANE)
        else:
            tb = batch                     # small batch: one full tile
    return tb


@functools.partial(jax.jit, static_argnames=("block_batch",))
def intent_classifier_forward(x, packed_params, *, block_batch=2048):
    """Fused forward pass.  x: (batch, input_dim) float32, packed_params from pack_params."""
    w1p, b1p, w2p, b2p, w3p, b3p, w4p, b4p = packed_params
    batch, input_dim = x.shape
    output_dim = w4p.shape[1]

    tb = _choose_batch_tile(batch, block_batch)
    grid = (pl.cdiv(batch, tb),)           # no batch padding; tail block is partial

    # Weights / biases: same block every step -> resident in VMEM.
    def resident(a):
        return pl.BlockSpec(a.shape, lambda i: (0, 0))

    out = pl.pallas_call(
        _mlp_kernel,
        out_shape=jax.ShapeDtypeStruct((batch, output_dim), jnp.float32),
        grid=grid,
        in_specs=[pl.BlockSpec((tb, input_dim), lambda i: (i, 0)),
                  resident(w1p), resident(b1p),
                  resident(w2p), resident(b2p),
                  resident(w3p), resident(b3p),
                  resident(w4p), resident(b4p)],
        out_specs=pl.BlockSpec((tb, output_dim), lambda i: (i, 0)),
        compiler_params=pltpu.CompilerParams(
            dimension_semantics=("parallel",)),
    )(x, w1p, b1p, w2p, b2p, w3p, b3p, w4p, b4p)

    return out


def init_params(key, input_dim, hidden_dim, output_dim):
    """Deterministic synthetic parameters matching the PyTorch module's shapes."""
    dims = [input_dim, hidden_dim, hidden_dim // 2, hidden_dim // 4, output_dim]
    params = []
    for i in range(4):
        key, kw, kb = jax.random.split(key, 3)
        fan_in = dims[i]
        bound = 1.0 / (fan_in ** 0.5)  # matches nn.Linear default init range
        w = jax.random.uniform(kw, (dims[i], dims[i + 1]), jnp.float32,
                               minval=-bound, maxval=bound)
        b = jax.random.uniform(kb, (1, dims[i + 1]), jnp.float32,
                               minval=-bound, maxval=bound)
        params.append((w, b))
    return params


if __name__ == "__main__":
    # Small shapes consistent with the module: a flat feature vector per example.
    batch, input_dim, hidden_dim, output_dim = 16, 64, 32, 8

    key = jax.random.PRNGKey(0)
    key, kx = jax.random.split(key)
    x = jax.random.normal(kx, (batch, input_dim), jnp.float32)

    params = init_params(key, input_dim, hidden_dim, output_dim)
    packed = pack_params(params)           # padded bf16 weights, packed once

    out = intent_classifier_forward(x, packed)
    out = jax.block_until_ready(out)

    # Reference in plain JAX (Dropout is identity in eval mode), mirroring the
    # kernel's bf16 weights/activations with f32 accumulation.
    # TODO(synk): exact f32 parity with the PyTorch module would require f32
    # weights/activations in the kernel; bf16 is used here for MXU efficiency.
    ref = x
    for i, (w, b) in enumerate(params):
        wq = w.astype(jnp.bfloat16).astype(jnp.float32)
        ref = ref.astype(jnp.bfloat16).astype(jnp.float32) @ wq + b
        if i < 3:
            ref = jnp.maximum(ref, 0.0)

    assert out.shape == (batch, output_dim)
    assert jnp.allclose(out, ref, atol=1e-2, rtol=1e-2)

    print("KERNEL_OK")
</pallas_src>

<mosaic_0001>
module attributes {stable_mosaic.version = 11 : i64} {
  func.func @_mlp_kernel(%arg0: i32, %arg1: memref<16x64xf32, #tpu.memory_space<vmem>>, %arg2: memref<64x128xbf16, #tpu.memory_space<vmem>>, %arg3: memref<1x128xf32, #tpu.memory_space<vmem>>, %arg4: memref<128x128xbf16, #tpu.memory_space<vmem>>, %arg5: memref<1x128xf32, #tpu.memory_space<vmem>>, %arg6: memref<128x128xbf16, #tpu.memory_space<vmem>>, %arg7: memref<1x128xf32, #tpu.memory_space<vmem>>, %arg8: memref<128x8xbf16, #tpu.memory_space<vmem>>, %arg9: memref<1x8xf32, #tpu.memory_space<vmem>>, %arg10: memref<16x8xf32, #tpu.memory_space<vmem>>) attributes {dimension_semantics = [#tpu.dimension_semantics<parallel>], iteration_bounds = array<i64: 1>, scalar_prefetch = 0 : i64, scratch_operands = 0 : i64, tpu.core_type = #tpu.core_type<tc>, window_params = [{transform_indices = @transform_0, window_bounds = array<i64: 16, 64>}, {pipeline_mode = #tpu.pipeline_mode<synchronous>, transform_indices = @transform_1, window_bounds = array<i64: 64, 128>}, {pipeline_mode = #tpu.pipeline_mode<synchronous>, transform_indices = @transform_2, window_bounds = array<i64: 1, 128>}, {pipeline_mode = #tpu.pipeline_mode<synchronous>, transform_indices = @transform_3, window_bounds = array<i64: 128, 128>}, {pipeline_mode = #tpu.pipeline_mode<synchronous>, transform_indices = @transform_4, window_bounds = array<i64: 1, 128>}, {pipeline_mode = #tpu.pipeline_mode<synchronous>, transform_indices = @transform_5, window_bounds = array<i64: 128, 128>}, {pipeline_mode = #tpu.pipeline_mode<synchronous>, transform_indices = @transform_6, window_bounds = array<i64: 1, 128>}, {pipeline_mode = #tpu.pipeline_mode<synchronous>, transform_indices = @transform_7, window_bounds = array<i64: 128, 8>}, {pipeline_mode = #tpu.pipeline_mode<synchronous>, transform_indices = @transform_8, window_bounds = array<i64: 1, 8>}, {transform_indices = @transform_9, window_bounds = array<i64: 16, 8>}]} {
    %c0 = arith.constant 0 : index
    %c0_0 = arith.constant 0 : index
    %0 = vector.load %arg1[%c0, %c0_0] : memref<16x64xf32, #tpu.memory_space<vmem>>, vector<16x64xf32>
    %1 = arith.truncf %0 : vector<16x64xf32> to vector<16x64xbf16>
    %c0_1 = arith.constant 0 : index
    %c0_2 = arith.constant 0 : index
    %2 = vector.load %arg2[%c0_1, %c0_2] : memref<64x128xbf16, #tpu.memory_space<vmem>>, vector<64x128xbf16>
    %cst = arith.constant dense<0.000000e+00> : vector<16x128xf32>
    %3 = tpu.matmul %1, %2, %cst {dimension_numbers = #tpu.dot_dimension_numbers<[1], [0], [0], [1], [0, 0, 1, 1], [], []>} : vector<16x64xbf16>, vector<64x128xbf16>, vector<16x128xf32> -> vector<16x128xf32>
    %c0_3 = arith.constant 0 : index
    %c0_4 = arith.constant 0 : index
    %4 = vector.load %arg3[%c0_3, %c0_4] : memref<1x128xf32, #tpu.memory_space<vmem>>, vector<1x128xf32>
    %5 = vector.broadcast %4 : vector<1x128xf32> to vector<16x128xf32>
    %6 = arith.addf %3, %5 : vector<16x128xf32>
    %cst_5 = arith.constant 0.000000e+00 : f32
    %7 = vector.broadcast %cst_5 : f32 to vector<16x128xf32>
    %8 = arith.maximumf %6, %7 : vector<16x128xf32>
    %9 = arith.truncf %8 : vector<16x128xf32> to vector<16x128xbf16>
    %c0_6 = arith.constant 0 : index
    %c0_7 = arith.constant 0 : index
    %10 = vector.load %arg4[%c0_6, %c0_7] : memref<128x128xbf16, #tpu.memory_space<vmem>>, vector<128x128xbf16>
    %cst_8 = arith.constant dense<0.000000e+00> : vector<16x128xf32>
    %11 = tpu.matmul %9, %10, %cst_8 {dimension_numbers = #tpu.dot_dimension_numbers<[1], [0], [0], [1], [0, 0, 1, 1], [], []>} : vector<16x128xbf16>, vector<128x128xbf16>, vector<16x128xf32> -> vector<16x128xf32>
    %c0_9 = arith.constant 0 : index
    %c0_10 = arith.constant 0 : index
    %12 = vector.load %arg5[%c0_9, %c0_10] : memref<1x128xf32, #tpu.memory_space<vmem>>, vector<1x128xf32>
    %13 = vector.broadcast %12 : vector<1x128xf32> to vector<16x128xf32>
    %14 = arith.addf %11, %13 : vector<16x128xf32>
    %cst_11 = arith.constant 0.000000e+00 : f32
    %15 = vector.broadcast %cst_11 : f32 to vector<16x128xf32>
    %16 = arith.maximumf %14, %15 : vector<16x128xf32>
    %17 = arith.truncf %16 : vector<16x128xf32> to vector<16x128xbf16>
    %c0_12 = arith.constant 0 : index
    %c0_13 = arith.constant 0 : index
    %18 = vector.load %arg6[%c0_12, %c0_13] : memref<128x128xbf16, #tpu.memory_space<vmem>>, vector<128x128xbf16>
    %cst_14 = arith.constant dense<0.000000e+00> : vector<16x128xf32>
    %19 = tpu.matmul %17, %18, %cst_14 {dimension_numbers = #tpu.dot_dimension_numbers<[1], [0], [0], [1], [0, 0, 1, 1], [], []>} : vector<16x128xbf16>, vector<128x128xbf16>, vector<16x128xf32> -> vector<16x128xf32>
    %c0_15 = arith.constant 0 : index
    %c0_16 = arith.constant 0 : index
    %20 = vector.load %arg7[%c0_15, %c0_16] : memref<1x128xf32, #tpu.memory_space<vmem>>, vector<1x128xf32>
    %21 = vector.broadcast %20 : vector<1x128xf32> to vector<16x128xf32>
    %22 = arith.addf %19, %21 : vector<16x128xf32>
    %cst_17 = arith.constant 0.000000e+00 : f32
    %23 = vector.broadcast %cst_17 : f32 to vector<16x128xf32>
    %24 = arith.maximumf %22, %23 : vector<16x128xf32>
    %25 = arith.truncf %24 : vector<16x128xf32> to vector<16x128xbf16>
    %c0_18 = arith.constant 0 : index
    %c0_19 = arith.constant 0 : index
    %26 = vector.load %arg8[%c0_18, %c0_19] : memref<128x8xbf16, #tpu.memory_space<vmem>>, vector<128x8xbf16>
    %cst_20 = arith.constant dense<0.000000e+00> : vector<16x8xf32>
    %27 = tpu.matmul %25, %26, %cst_20 {dimension_numbers = #tpu.dot_dimension_numbers<[1], [0], [0], [1], [0, 0, 1, 1], [], []>} : vector<16x128xbf16>, vector<128x8xbf16>, vector<16x8xf32> -> vector<16x8xf32>
    %c0_21 = arith.constant 0 : index
    %c0_22 = arith.constant 0 : index
    %28 = vector.load %arg9[%c0_21, %c0_22] : memref<1x8xf32, #tpu.memory_space<vmem>>, vector<1x8xf32>
    %29 = vector.broadcast %28 : vector<1x8xf32> to vector<16x8xf32>
    %30 = arith.addf %27, %29 : vector<16x8xf32>
    %c0_23 = arith.constant 0 : index
    %c0_24 = arith.constant 0 : index
    %31 = vector.load %arg10[%c0_23, %c0_24] : memref<16x8xf32, #tpu.memory_space<vmem>>, vector<16x8xf32>
    tpu.vector_store %arg10[%c0_23, %c0_24], %30 {strides = array<i32>} : memref<16x8xf32, #tpu.memory_space<vmem>>, vector<16x8xf32>,
    return
  }
  func.func @transform_0(%arg0: i32) -> (i32, i32) {
    %c0_i32 = arith.constant 0 : i32
    %c0_i32_0 = arith.constant 0 : i32
    return %arg0, %c0_i32 : i32, i32
  }
  func.func @transform_1(%arg0: i32) -> (i32, i32) {
    %c0_i32 = arith.constant 0 : i32
    %c0_i32_0 = arith.constant 0 : i32
    %c0_i32_1 = arith.constant 0 : i32
    return %c0_i32, %c0_i32_0 : i32, i32
  }
  func.func @transform_2(%arg0: i32) -> (i32, i32) {
    %c0_i32 = arith.constant 0 : i32
    %c0_i32_0 = arith.constant 0 : i32
    %c0_i32_1 = arith.constant 0 : i32
    return %c0_i32, %c0_i32_0 : i32, i32
  }
  func.func @transform_3(%arg0: i32) -> (i32, i32) {
    %c0_i32 = arith.constant 0 : i32
    %c0_i32_0 = arith.constant 0 : i32
    %c0_i32_1 = arith.constant 0 : i32
    return %c0_i32, %c0_i32_0 : i32, i32
  }
  func.func @transform_4(%arg0: i32) -> (i32, i32) {
    %c0_i32 = arith.constant 0 : i32
    %c0_i32_0 = arith.constant 0 : i32
    %c0_i32_1 = arith.constant 0 : i32
    return %c0_i32, %c0_i32_0 : i32, i32
  }
  func.func @transform_5(%arg0: i32) -> (i32, i32) {
    %c0_i32 = arith.constant 0 : i32
    %c0_i32_0 = arith.constant 0 : i32
    %c0_i32_1 = arith.constant 0 : i32
    return %c0_i32, %c0_i32_0 : i32, i32
  }
  func.func @transform_6(%arg0: i32) -> (i32, i32) {
    %c0_i32 = arith.constant 0 : i32
    %c0_i32_0 = arith.constant 0 : i32
    %c0_i32_1 = arith.constant 0 : i32
    return %c0_i32, %c0_i32_0 : i32, i32
  }
  func.func @transform_7(%arg0: i32) -> (i32, i32) {
    %c0_i32 = arith.constant 0 : i32
    %c0_i32_0 = arith.constant 0 : i32
    %c0_i32_1 = arith.constant 0 : i32
    return %c0_i32, %c0_i32_0 : i32, i32
  }
  func.func @transform_8(%arg0: i32) -> (i32, i32) {
    %c0_i32 = arith.constant 0 : i32
    %c0_i32_0 = arith.constant 0 : i32
    %c0_i32_1 = arith.constant 0 : i32
    return %c0_i32, %c0_i32_0 : i32, i32
  }
  func.func @transform_9(%arg0: i32) -> (i32, i32) {
    %c0_i32 = arith.constant 0 : i32
    %c0_i32_0 = arith.constant 0 : i32
    return %arg0, %c0_i32 : i32, i32
  }
}

</mosaic_0001>

<llo_original>
// kernel: intent_classifier_forward.1
$region0: #{intent_classifier_forward.1}
  #allocation0 [shape = 'u32[]', space=smem, size = 0x4, offset = 0x4, fixed_abs, tag = 'smem constant byte address 0x4 - core index']
  #allocation1 [shape = 'u32[144,128]{1,0:T(1,128)}', space=vmem, size = 0x12000, scoped, tag = 'internal scratch']
  %s0 = inlined_call_operand.hbm [shape: f32[16,64], index: 0, kind: input, shape index: {}]
  %s1 = inlined_call_operand.hbm [shape: bf16[64,128], index: 1, kind: input, shape index: {}]
  %s2 = inlined_call_operand.vmem [shape: f32[1,128], index: 2, kind: input, shape index: {}]
  %s3 = inlined_call_operand.vmem [shape: bf16[128,128], index: 3, kind: input, shape index: {}]
  %s4 = inlined_call_operand.vmem [shape: f32[1,128], index: 4, kind: input, shape index: {}]
  %s5 = inlined_call_operand.hbm [shape: bf16[128,128], index: 5, kind: input, shape index: {}]
  %s6 = inlined_call_operand.vmem [shape: f32[1,128], index: 6, kind: input, shape index: {}]
  %s7 = inlined_call_operand.vmem [shape: bf16[128,8], index: 7, kind: input, shape index: {}]
  %s8 = inlined_call_operand.vmem [shape: f32[1,8], index: 8, kind: input, shape index: {}]
  %s9 = inlined_call_operand.vmem [shape: f32[16,8], index: 9, kind: output, shape index: {}]
  %s10 = sld [smem:[#allocation0]]
  $region58: #{intent_classifier_forward.1} parent=0
    _
  %s12 = ssub.s32 1, %s10
  %s13 = scalar_select 0, %s12, %s10
  $region1: #{intent_classifier_forward.1} parent=0
    #allocation2 [shape = 'u8[8192]{0}', space=vmem, size = 0x2000, scoped, tag = 'input window, operand 0, single buffered']
    #allocation3 [shape = 's32[1]{0}', space=sflag, size = 0x4, scoped, tag = 'scoped memory for intent_classifier_forward.1']
    #allocation4 [shape = 'u8[16384]{0}', space=vmem, size = 0x4000, scoped, tag = 'input window, operand 1, single buffered']
    #allocation5 [shape = 's32[1]{0}', space=sflag, size = 0x4, scoped, tag = 'scoped memory for intent_classifier_forward.1']
    #allocation6 [shape = 'u8[32768]{0}', space=vmem, size = 0x8000, scoped, tag = 'input window, operand 5, single buffered']
    %14 = vsyncpa [#allocation3], 0
    %15 = vsyncpa [#allocation5], 0
    // Predicated region
    $region2: #{intent_classifier_forward.1} parent=1 // pred_check
      _
    $region3: #{intent_classifier_forward.1} parent=1 // pred_check_branch
      %17 = sbr.rel (0) target = $region5
    $region4: #{intent_classifier_forward.1} parent=1 // pred_region
      %s19 = ssub.s32 256, 256
      %20 = vsyncadd [#allocation3], %s19
      %s21 = sshll.u32 [#allocation2], 4
      %s22 = int_to_ptr.vmem [resolvable:$true] %s21
      %27 = dma.hbm_to_vmem [thread:$0]  %s0, 256, %s22, [#allocation3], 128, 128, 8
    $region5: #{intent_classifier_forward.1} parent=1 // pred_fallthru
      _
    // Predicated region
    $region6: #{intent_classifier_forward.1} parent=1 // pred_check
      _
    $region7: #{intent_classifier_forward.1} parent=1 // pred_check_branch
      %29 = sbr.rel (0) target = $region9
    $region8: #{intent_classifier_forward.1} parent=1 // pred_region
      %s31 = ssub.s32 512, 512
      %32 = vsyncadd [#allocation5], %s31
      %s33 = sshll.u32 [#allocation4], 4
      %s34 = int_to_ptr.vmem [resolvable:$true] %s33
      %39 = dma.hbm_to_vmem [thread:$0]  %s1, 512, %s34, [#allocation5], 64, 64, 4
    $region9: #{intent_classifier_forward.1} parent=1 // pred_fallthru
      _
    // Predicated region
    $region10: #{intent_classifier_forward.1} parent=1 // pred_check
      _
    $region11: #{intent_classifier_forward.1} parent=1 // pred_check_branch
      %41 = sbr.rel (0) target = $region13
    $region12: #{intent_classifier_forward.1} parent=1 // pred_region
      _
    $region13: #{intent_classifier_forward.1} parent=1 // pred_fallthru
      _
    // Predicated region
    $region14: #{intent_classifier_forward.1} parent=1 // pred_check
      _
    $region15: #{intent_classifier_forward.1} parent=1 // pred_check_branch
      %43 = sbr.rel (0) target = $region17
    $region16: #{intent_classifier_forward.1} parent=1 // pred_region
      _
    $region17: #{intent_classifier_forward.1} parent=1 // pred_fallthru
      _
    // Predicated region
    $region18: #{intent_classifier_forward.1} parent=1 // pred_check
      _
    $region19: #{intent_classifier_forward.1} parent=1 // pred_check_branch
      %45 = sbr.rel (0) target = $region21
    $region20: #{intent_classifier_forward.1} parent=1 // pred_region
      _
    $region21: #{intent_classifier_forward.1} parent=1 // pred_fallthru
      _
    // Predicated region
    $region22: #{intent_classifier_forward.1} parent=1 // pred_check
      _
    $region23: #{intent_classifier_forward.1} parent=1 // pred_check_branch
      %47 = sbr.rel (0) target = $region25
    $region24: #{intent_classifier_forward.1} parent=1 // pred_region
      %s49 = ssub.s32 1024, 1024
      %50 = vsyncadd [#allocation5], %s49
      %s51 = sshll.u32 [#allocation6], 4
      %s52 = int_to_ptr.vmem [resolvable:$true] %s51
      %57 = dma.hbm_to_vmem [thread:$0]  %s5, 1024, %s52, [#allocation5], 64, 64, 4
    $region25: #{intent_classifier_forward.1} parent=1 // pred_fallthru
      _
    // Predicated region
    $region26: #{intent_classifier_forward.1} parent=1 // pred_check
      _
    $region27: #{intent_classifier_forward.1} parent=1 // pred_check_branch
      %59 = sbr.rel (0) target = $region29
    $region28: #{intent_classifier_forward.1} parent=1 // pred_region
      _
    $region29: #{intent_classifier_forward.1} parent=1 // pred_fallthru
      _
    // Predicated region
    $region30: #{intent_classifier_forward.1} parent=1 // pred_check
      _
    $region31: #{intent_classifier_forward.1} parent=1 // pred_check_branch
      %61 = sbr.rel (0) target = $region33
    $region32: #{intent_classifier_forward.1} parent=1 // pred_region
      _
    $region33: #{intent_classifier_forward.1} parent=1 // pred_fallthru
      _
    // Predicated region
    $region34: #{intent_classifier_forward.1} parent=1 // pred_check
      _
    $region35: #{intent_classifier_forward.1} parent=1 // pred_check_branch
      %63 = sbr.rel (0) target = $region37
    $region36: #{intent_classifier_forward.1} parent=1 // pred_region
      _
    $region37: #{intent_classifier_forward.1} parent=1 // pred_fallthru
      _
    // Predicated region
    $region38: #{intent_classifier_forward.1} parent=1 // pred_check
      _
    $region39: #{intent_classifier_forward.1} parent=1 // pred_check_branch
      %65 = sbr.rel (0) target = $region41
    $region40: #{intent_classifier_forward.1} parent=1 // pred_region
      %66 = dma.done [#allocation3], 256
    $region41: #{intent_classifier_forward.1} parent=1 // pred_fallthru
      _
    // Predicated region
    $region42: #{intent_classifier_forward.1} parent=1 // pred_check
      _
    $region43: #{intent_classifier_forward.1} parent=1 // pred_check_branch
      %68 = sbr.rel (0) target = $region45
    $region44: #{intent_classifier_forward.1} parent=1 // pred_region
      %69 = dma.done [#allocation5], 512
    $region45: #{intent_classifier_forward.1} parent=1 // pred_fallthru
      _
    // Predicated region
    $region46: #{intent_classifier_forward.1} parent=1 // pred_check
      _
    $region47: #{intent_classifier_forward.1} parent=1 // pred_check_branch
      %71 = sbr.rel (0) target = $region49
    $region48: #{intent_classifier_forward.1} parent=1 // pred_region
      %72 = dma.done [#allocation5], 1024
    $region49: #{intent_classifier_forward.1} parent=1 // pred_fallthru
      _
    %v74 = vld [vmem:[#allocation2] sm:$0xff]
    %v75 = vld [vmem:[#allocation2 + $0x8] sm:$0xff]
    %v76 = vpack.c.bf16 %v75, %v74
    %v77 = vld [vmem:[#allocation4] sm:$0xf]
    %v78 = vld [vmem:[#allocation4 + $0x4] sm:$0xf]
    %v79 = vld [vmem:[#allocation4 + $0x8] sm:$0xf]
    %v80 = vld [vmem:[#allocation4 + $0xc] sm:$0xf]
    %v81 = vld [vmem:[#allocation4 + $0x10] sm:$0xf]
    %v82 = vld [vmem:[#allocation4 + $0x14] sm:$0xf]
    %v83 = vld [vmem:[#allocation4 + $0x18] sm:$0xf]
    %v84 = vld [vmem:[#allocation4 + $0x1c] sm:$0xf]
    %v85 = vld [vmem:[%s2] sm:$0x1]
    %v87 = vlaneseq
    %v88 = vshrl.u32 %v87, 7
    %v89 = vsub.s32 0, %v88
    %v90 = vrot.slane %v85, %v89
    %v100 = vunpack.c.l.b16 %v77
    %v101 = vunpack.c.l.b16 %v78
    %v102 = vunpack.c.l.b16 %v79
    %v103 = vunpack.c.l.b16 %v80
    %v104 = vunpack.c.l.b16 %v81
    %v105 = vunpack.c.l.b16 %v82
    %v106 = vunpack.c.l.b16 %v83
    %v107 = vunpack.c.l.b16 %v84
    %v108 = vpack.c.b16 %v101, %v100
    %v109 = vpack.c.b16 %v103, %v102
    %v110 = vpack.c.b16 %v105, %v104
    %v111 = vpack.c.b16 %v107, %v106
    %vm116 = vcmask 523264
    %v118 = vsel %vm116, %v76, 0
    %120 = vmatprep.subr.bf16.mxu0 0
    %121 = vmatpush1.bf16.msra.mxu0 0
    %122 = vmatprep.subr.bf16.mxu0 0
    %123 = vmatpush1.bf16.msra.mxu0 0
    %124 = vmatprep.subr.bf16.mxu0 0
    %125 = vmatpush1.bf16.msra.mxu0 0
    %126 = vmatprep.subr.bf16.mxu0 0
    %127 = vmatpush1.bf16.msra.mxu0 0
    %128 = vmatprep.subr.bf16.mxu0 0
    %129 = vmatpush1.bf16.msra.mxu0 %v111
    %130 = vmatprep.subr.bf16.mxu0 0
    %131 = vmatpush1.bf16.msra.mxu0 %v110
    %132 = vmatprep.subr.bf16.mxu0 0
    %133 = vmatpush1.bf16.msra.mxu0 %v109
    %134 = vmatprep.subr.bf16.mxu0 0
    %135 = vmatpush1.bf16.msra.mxu0 %v108
    %136 = vmatprep.subr.bf16.mxu0 0
    %137 = vmatpush2.bf16.msra.mxu0 0
    %138 = vmatprep.subr.bf16.mxu0 0
    %139 = vmatpush2.bf16.msra.mxu0 0
    %140 = vmatprep.subr.bf16.mxu0 0
    %141 = vmatpush2.bf16.msra.mxu0 0
    %142 = vmatprep.subr.bf16.mxu0 0
    %143 = vmatpush2.bf16.msra.mxu0 0
    %144 = vmatprep.subr.bf16.mxu0 0
    %145 = vmatpush2.bf16.msra.mxu0 0
    %146 = vmatprep.subr.bf16.mxu0 0
    %147 = vmatpush2.bf16.msra.mxu0 0
    %148 = vmatprep.subr.bf16.mxu0 0
    %149 = vmatpush2.bf16.msra.mxu0 0
    %150 = vmatprep.subr.bf16.mxu0 0
    %151 = vmatpush2.bf16.msra.mxu0 0
    %152 = vmatprep.mubr.bf16.mxu0 0
    %153 = vmatmul.mubr.bf16.gmra.mxu0 %v118
    %v154 = vpop.f32.mrf.mxu0
    %v155 = vadd.f32 %v90, %v154
    %v156 = vpop.f32.mrf.mxu0
    %v157 = vpop.f32.mrf.mxu0
    %v158 = vadd.f32 %v90, %v157
    %v159 = vpop.f32.mrf.mxu0
    %160 = vdwg.mxu0
    %v161 = vmax.f32 %v155, 0.0
    %v162 = vmax.f32 %v158, 0.0
    %v163 = vpack.c.bf16 %v162, %v161
    %v164 = vld [vmem:[%s3] sm:$0xf]
    %v165 = vld [vmem:[%s3 + $0x4] sm:$0xf]
    %v166 = vld [vmem:[%s3 + $0x8] sm:$0xf]
    %v167 = vld [vmem:[%s3 + $0xc] sm:$0xf]
    %v168 = vld [vmem:[%s3 + $0x10] sm:$0xf]
    %v169 = vld [vmem:[%s3 + $0x14] sm:$0xf]
    %v170 = vld [vmem:[%s3 + $0x18] sm:$0xf]
    %v171 = vld [vmem:[%s3 + $0x1c] sm:$0xf]
    %v172 = vld [vmem:[%s3 + $0x20] sm:$0xf]
    %v173 = vld [vmem:[%s3 + $0x24] sm:$0xf]
    %v174 = vld [vmem:[%s3 + $0x28] sm:$0xf]
    %v175 = vld [vmem:[%s3 + $0x2c] sm:$0xf]
    %v176 = vld [vmem:[%s3 + $0x30] sm:$0xf]
    %v177 = vld [vmem:[%s3 + $0x34] sm:$0xf]
    %v178 = vld [vmem:[%s3 + $0x38] sm:$0xf]
    %v179 = vld [vmem:[%s3 + $0x3c] sm:$0xf]
    %v180 = vld [vmem:[%s4] sm:$0x1]
    %v182 = vlaneseq
    %v183 = vshrl.u32 %v182, 7
    %v184 = vsub.s32 0, %v183
    %v185 = vrot.slane %v180, %v184
    %v203 = vunpack.c.l.b16 %v164
    %v204 = vunpack.c.l.b16 %v165
    %v205 = vunpack.c.l.b16 %v166
    %v206 = vunpack.c.l.b16 %v167
    %v207 = vunpack.c.l.b16 %v168
    %v208 = vunpack.c.l.b16 %v169
    %v209 = vunpack.c.l.b16 %v170
    %v210 = vunpack.c.l.b16 %v171
    %v211 = vunpack.c.l.b16 %v172
    %v212 = vunpack.c.l.b16 %v173
    %v213 = vunpack.c.l.b16 %v174
    %v214 = vunpack.c.l.b16 %v175
    %v215 = vunpack.c.l.b16 %v176
    %v216 = vunpack.c.l.b16 %v177
    %v217 = vunpack.c.l.b16 %v178
    %v218 = vunpack.c.l.b16 %v179
    %v219 = vpack.c.b16 %v204, %v203
    %v220 = vpack.c.b16 %v206, %v205
    %v221 = vpack.c.b16 %v208, %v207
    %v222 = vpack.c.b16 %v210, %v209
    %v223 = vpack.c.b16 %v212, %v211
    %v224 = vpack.c.b16 %v214, %v213
    %v225 = vpack.c.b16 %v216, %v215
    %v226 = vpack.c.b16 %v218, %v217
    %235 = vmatprep.subr.bf16.mxu0 0
    %236 = vmatpush1.bf16.msra.mxu0 %v226
    %237 = vmatprep.subr.bf16.mxu0 0
    %238 = vmatpush1.bf16.msra.mxu0 %v225
    %239 = vmatprep.subr.bf16.mxu0 0
    %240 = vmatpush1.bf16.msra.mxu0 %v224
    %241 = vmatprep.subr.bf16.mxu0 0
    %242 = vmatpush1.bf16.msra.mxu0 %v223
    %243 = vmatprep.subr.bf16.mxu0 0
    %244 = vmatpush1.bf16.msra.mxu0 %v222
    %245 = vmatprep.subr.bf16.mxu0 0
    %246 = vmatpush1.bf16.msra.mxu0 %v221
    %247 = vmatprep.subr.bf16.mxu0 0
    %248 = vmatpush1.bf16.msra.mxu0 %v220
    %249 = vmatprep.subr.bf16.mxu0 0
    %250 = vmatpush1.bf16.msra.mxu0 %v219
    %251 = vmatprep.subr.bf16.mxu0 0
    %252 = vmatpush2.bf16.msra.mxu0 0
    %253 = vmatprep.subr.bf16.mxu0 0
    %254 = vmatpush2.bf16.msra.mxu0 0
    %255 = vmatprep.subr.bf16.mxu0 0
    %256 = vmatpush2.bf16.msra.mxu0 0
    %257 = vmatprep.subr.bf16.mxu0 0
    %258 = vmatpush2.bf16.msra.mxu0 0
    %259 = vmatprep.subr.bf16.mxu0 0
    %260 = vmatpush2.bf16.msra.mxu0 0
    %261 = vmatprep.subr.bf16.mxu0 0
    %262 = vmatpush2.bf16.msra.mxu0 0
    %263 = vmatprep.subr.bf16.mxu0 0
    %264 = vmatpush2.bf16.msra.mxu0 0
    %265 = vmatprep.subr.bf16.mxu0 0
    %266 = vmatpush2.bf16.msra.mxu0 0
    %267 = vmatprep.mubr.bf16.mxu0 0
    %268 = vmatmul.mubr.bf16.gmra.mxu0 %v163
    %v269 = vpop.f32.mrf.mxu0
    %v270 = vadd.f32 %v185, %v269
    %v271 = vpop.f32.mrf.mxu0
    %v272 = vpop.f32.mrf.mxu0
    %v273 = vadd.f32 %v185, %v272
    %v274 = vpop.f32.mrf.mxu0
    %275 = vdwg.mxu0
    %v276 = vmax.f32 %v270, 0.0
    %v277 = vmax.f32 %v273, 0.0
    %v278 = vpack.c.bf16 %v277, %v276
    %v279 = vld [vmem:[#allocation6] sm:$0xf]
    %v280 = vld [vmem:[#allocation6 + $0x4] sm:$0xf]
    %v281 = vld [vmem:[#allocation6 + $0x8] sm:$0xf]
    %v282 = vld [vmem:[#allocation6 + $0xc] sm:$0xf]
    %v283 = vld [vmem:[#allocation6 + $0x10] sm:$0xf]
    %v284 = vld [vmem:[#allocation6 + $0x14] sm:$0xf]
    %v285 = vld [vmem:[#allocation6 + $0x18] sm:$0xf]
    %v286 = vld [vmem:[#allocation6 + $0x1c] sm:$0xf]
    %v287 = vld [vmem:[#allocation6 + $0x20] sm:$0xf]
    %v288 = vld [vmem:[#allocation6 + $0x24] sm:$0xf]
    %v289 = vld [vmem:[#allocation6 + $0x28] sm:$0xf]
    %v290 = vld [vmem:[#allocation6 + $0x2c] sm:$0xf]
    %v291 = vld [vmem:[#allocation6 + $0x30] sm:$0xf]
    %v292 = vld [vmem:[#allocation6 + $0x34] sm:$0xf]
    %v293 = vld [vmem:[#allocation6 + $0x38] sm:$0xf]
    %v294 = vld [vmem:[#allocation6 + $0x3c] sm:$0xf]
    %v295 = vld [vmem:[%s6] sm:$0x1]
    %v297 = vlaneseq
    %v298 = vshrl.u32 %v297, 7
    %v299 = vsub.s32 0, %v298
    %v300 = vrot.slane %v295, %v299
    %v318 = vunpack.c.l.b16 %v279
    %v319 = vunpack.c.l.b16 %v280
    %v320 = vunpack.c.l.b16 %v281
    %v321 = vunpack.c.l.b16 %v282
    %v322 = vunpack.c.l.b16 %v283
    %v323 = vunpack.c.l.b16 %v284
    %v324 = vunpack.c.l.b16 %v285
    %v325 = vunpack.c.l.b16 %v286
    %v326 = vunpack.c.l.b16 %v287
    %v327 = vunpack.c.l.b16 %v288
    %v328 = vunpack.c.l.b16 %v289
    %v329 = vunpack.c.l.b16 %v290
    %v330 = vunpack.c.l.b16 %v291
    %v331 = vunpack.c.l.b16 %v292
    %v332 = vunpack.c.l.b16 %v293
    %v333 = vunpack.c.l.b16 %v294
    %v334 = vpack.c.b16 %v319, %v318
    %v335 = vpack.c.b16 %v321, %v320
    %v336 = vpack.c.b16 %v323, %v322
    %v337 = vpack.c.b16 %v325, %v324
    %v338 = vpack.c.b16 %v327, %v326
    %v339 = vpack.c.b16 %v329, %v328
    %v340 = vpack.c.b16 %v331, %v330
    %v341 = vpack.c.b16 %v333, %v332
    %350 = vmatprep.subr.bf16.mxu0 0
    %351 = vmatpush1.bf16.msra.mxu0 %v341
    %352 = vmatprep.subr.bf16.mxu0 0
    %353 = vmatpush1.bf16.msra.mxu0 %v340
    %354 = vmatprep.subr.bf16.mxu0 0
    %355 = vmatpush1.bf16.msra.mxu0 %v339
    %356 = vmatprep.subr.bf16.mxu0 0
    %357 = vmatpush1.bf16.msra.mxu0 %v338
    %358 = vmatprep.subr.bf16.mxu0 0
    %359 = vmatpush1.bf16.msra.mxu0 %v337
    %360 = vmatprep.subr.bf16.mxu0 0
    %361 = vmatpush1.bf16.msra.mxu0 %v336
    %362 = vmatprep.subr.bf16.mxu0 0
    %363 = vmatpush1.bf16.msra.mxu0 %v335
    %364 = vmatprep.subr.bf16.mxu0 0
    %365 = vmatpush1.bf16.msra.mxu0 %v334
    %366 = vmatprep.subr.bf16.mxu0 0
    %367 = vmatpush2.bf16.msra.mxu0 0
    %368 = vmatprep.subr.bf16.mxu0 0
    %369 = vmatpush2.bf16.msra.mxu0 0
    %370 = vmatprep.subr.bf16.mxu0 0
    %371 = vmatpush2.bf16.msra.mxu0 0
    %372 = vmatprep.subr.bf16.mxu0 0
    %373 = vmatpush2.bf16.msra.mxu0 0
    %374 = vmatprep.subr.bf16.mxu0 0
    %375 = vmatpush2.bf16.msra.mxu0 0
    %376 = vmatprep.subr.bf16.mxu0 0
    %377 = vmatpush2.bf16.msra.mxu0 0
    %378 = vmatprep.subr.bf16.mxu0 0
    %379 = vmatpush2.bf16.msra.mxu0 0
    %380 = vmatprep.subr.bf16.mxu0 0
    %381 = vmatpush2.bf16.msra.mxu0 0
    %382 = vmatprep.mubr.bf16.mxu0 0
    %383 = vmatmul.mubr.bf16.gmra.mxu0 %v278
    %v384 = vpop.f32.mrf.mxu0
    %v385 = vadd.f32 %v300, %v384
    %v386 = vpop.f32.mrf.mxu0
    %v387 = vpop.f32.mrf.mxu0
    %v388 = vadd.f32 %v300, %v387
    %v389 = vpop.f32.mrf.mxu0
    %390 = vdwg.mxu0
    %v391 = vmax.f32 %v385, 0.0
    %v392 = vmax.f32 %v388, 0.0
    %v393 = vpack.c.bf16 %v392, %v391
    %v394 = vld [vmem:[%s7] sm:$0xf]
    %v395 = vld [vmem:[%s7 + $0x4] sm:$0xf]
    %v396 = vld [vmem:[%s7 + $0x8] sm:$0xf]
    %v397 = vld [vmem:[%s7 + $0xc] sm:$0xf]
    %v398 = vld [vmem:[%s7 + $0x10] sm:$0xf]
    %v399 = vld [vmem:[%s7 + $0x14] sm:$0xf]
    %v400 = vld [vmem:[%s7 + $0x18] sm:$0xf]
    %v401 = vld [vmem:[%s7 + $0x1c] sm:$0xf]
    %v402 = vld [vmem:[%s7 + $0x20] sm:$0xf]
    %v403 = vld [vmem:[%s7 + $0x24] sm:$0xf]
    %v404 = vld [vmem:[%s7 + $0x28] sm:$0xf]
    %v405 = vld [vmem:[%s7 + $0x2c] sm:$0xf]
    %v406 = vld [vmem:[%s7 + $0x30] sm:$0xf]
    %v407 = vld [vmem:[%s7 + $0x34] sm:$0xf]
    %v408 = vld [vmem:[%s7 + $0x38] sm:$0xf]
    %v409 = vld [vmem:[%s7 + $0x3c] sm:$0xf]
    %v410 = vld [vmem:[%s8] sm:$0x1]
    %v412 = vlaneseq
    %v413 = vshrl.u32 %v412, 7
    %v414 = vsub.s32 0, %v413
    %v415 = vrot.slane %v410, %v414
    %v433 = vunpack.c.l.b16 %v394
    %v434 = vunpack.c.l.b16 %v395
    %v435 = vunpack.c.l.b16 %v396
    %v436 = vunpack.c.l.b16 %v397
    %v437 = vunpack.c.l.b16 %v398
    %v438 = vunpack.c.l.b16 %v399
    %v439 = vunpack.c.l.b16 %v400
    %v440 = vunpack.c.l.b16 %v401
    %v441 = vunpack.c.l.b16 %v402
    %v442 = vunpack.c.l.b16 %v403
    %v443 = vunpack.c.l.b16 %v404
    %v444 = vunpack.c.l.b16 %v405
    %v445 = vunpack.c.l.b16 %v406
    %v446 = vunpack.c.l.b16 %v407
    %v447 = vunpack.c.l.b16 %v408
    %v448 = vunpack.c.l.b16 %v409
    %v449 = vpack.c.b16 %v434, %v433
    %v450 = vpack.c.b16 %v436, %v435
    %v451 = vpack.c.b16 %v438, %v437
    %v452 = vpack.c.b16 %v440, %v439
    %v453 = vpack.c.b16 %v442, %v441
    %v454 = vpack.c.b16 %v444, %v443
    %v455 = vpack.c.b16 %v446, %v445
    %v456 = vpack.c.b16 %v448, %v447
    %465 = vmatprep.subr.bf16.mxu0 0
    %466 = vmatpush1.bf16.msra.mxu0 %v456
    %467 = vmatprep.subr.bf16.mxu0 0
    %468 = vmatpush1.bf16.msra.mxu0 %v455
    %469 = vmatprep.subr.bf16.mxu0 0
    %470 = vmatpush1.bf16.msra.mxu0 %v454
    %471 = vmatprep.subr.bf16.mxu0 0
    %472 = vmatpush1.bf16.msra.mxu0 %v453
    %473 = vmatprep.subr.bf16.mxu0 0
    %474 = vmatpush1.bf16.msra.mxu0 %v452
    %475 = vmatprep.subr.bf16.mxu0 0
    %476 = vmatpush1.bf16.msra.mxu0 %v451
    %477 = vmatprep.subr.bf16.mxu0 0
    %478 = vmatpush1.bf16.msra.mxu0 %v450
    %479 = vmatprep.subr.bf16.mxu0 0
    %480 = vmatpush1.bf16.msra.mxu0 %v449
    %481 = vmatprep.subr.bf16.mxu0 0
    %482 = vmatpush2.bf16.msra.mxu0 0
    %483 = vmatprep.subr.bf16.mxu0 0
    %484 = vmatpush2.bf16.msra.mxu0 0
    %485 = vmatprep.subr.bf16.mxu0 0
    %486 = vmatpush2.bf16.msra.mxu0 0
    %487 = vmatprep.subr.bf16.mxu0 0
    %488 = vmatpush2.bf16.msra.mxu0 0
    %489 = vmatprep.subr.bf16.mxu0 0
    %490 = vmatpush2.bf16.msra.mxu0 0
    %491 = vmatprep.subr.bf16.mxu0 0
    %492 = vmatpush2.bf16.msra.mxu0 0
    %493 = vmatprep.subr.bf16.mxu0 0
    %494 = vmatpush2.bf16.msra.mxu0 0
    %495 = vmatprep.subr.bf16.mxu0 0
    %496 = vmatpush2.bf16.msra.mxu0 0
    %497 = vmatprep.mubr.bf16.mxu0 0
    %498 = vmatmul.mubr.bf16.gmra.mxu0 %v393
    %v499 = vpop.f32.mrf.mxu0
    %v500 = vadd.f32 %v415, %v499
    %v501 = vpop.f32.mrf.mxu0
    %v502 = vpop.f32.mrf.mxu0
    %v503 = vadd.f32 %v415, %v502
    %v504 = vpop.f32.mrf.mxu0
    %505 = vdwg.mxu0
    %vm506 = vcmask 64512
    %507 = vst.msk [vmem:[%s9] sm:$0xff] %vm506, %v500
    %508 = vst.msk [vmem:[%s9 + $0x8] sm:$0xff] %vm506, %v503
    // Predicated region
    $region50: #{intent_classifier_forward.1} parent=1 // pred_check
      _
    $region51: #{intent_classifier_forward.1} parent=1 // pred_check_branch
      %510 = sbr.rel (0) target = $region53
    $region52: #{intent_classifier_forward.1} parent=1 // pred_region
      _
    $region53: #{intent_classifier_forward.1} parent=1 // pred_fallthru
      _
    // Predicated region
    $region54: #{intent_classifier_forward.1} parent=1 // pred_check
      _
    $region55: #{intent_classifier_forward.1} parent=1 // pred_check_branch
      %512 = sbr.rel (0) target = $region57
    $region56: #{intent_classifier_forward.1} parent=1 // pred_region
      _
    $region57: #{intent_classifier_forward.1} parent=1 // pred_fallthru
      _
    %513 = vsyncpa [#allocation3], 1
    %514 = vsyncpa [#allocation5], 1

</llo_original>
